<compile_context>
chip_gen: v7x
topology: tpu7x:2x2x1
jax: 0.10.0
libtpu: 0.0.40
codegen_flags: <defaults>
</compile_context>

<pallas_src>
import functools

import jax
import jax.numpy as jnp
import numpy as np
from jax import lax
from jax.experimental import pallas as pl
from jax.experimental.pallas import tpu as pltpu


_POINTWISE_FMA_MAX = 128   # use the VPU outer-product path when C*Cout <= this


def _sepconv_kernel(x_ref, dw_ref, pw_ref, o_ref, xpad_ref, *,
                    k, stride, dilation, pad, H, W, Wo, C, th,
                    pointwise_mxu, refill_every_tile):
    """One (batch, output-row-tile) grid step.

    x_ref   : [1, C, H, W]     raw input block (auto-pipelined), VMEM
    dw_ref  : [k*k, C, 1, Wo]  depthwise taps, lane-pre-broadcast, VMEM f32
    pw_ref  : [Cout, C]        pointwise (1x1) weights, VMEM
    o_ref   : [1, Cout, th*Wo] lane-dense flattened output block
    xpad_ref: [C, Hp, Wp]      zero-padded image scratch (persists across tiles)
    """
    i = pl.program_id(1)                    # output-row-tile index
    Hp = H + 2 * pad
    Wp = W + 2 * pad
    xdt = xpad_ref.dtype

    # ---- padded-image fill: border-only zeroing + interior copy -------------
    def fill_padded():
        if pad > 0:
            zrow = jnp.zeros((C, pad, Wp), xdt)
            zcol = jnp.zeros((C, H, pad), xdt)
            xpad_ref[:, 0:pad, :] = zrow                    # top border
            xpad_ref[:, Hp - pad:Hp, :] = zrow              # bottom border
            xpad_ref[:, pad:pad + H, 0:pad] = zcol          # left border
            xpad_ref[:, pad:pad + H, Wp - pad:Wp] = zcol    # right border
        xpad_ref[:, pad:pad + H, pad:pad + W] = x_ref[0]

    if refill_every_tile:
        fill_padded()                       # row-tile axis runs "parallel"
    else:
        pl.when(i == 0)(fill_padded)        # once per batch element

    row_base = pl.multiple_of(i * (th * stride), th * stride)

    # ---- depthwise: k*k channel-vectorized FMAs on the VPU ------------------
    acc = None
    for kh in range(k):
        for kw in range(k):
            t = kh * k + kw
            tap = dw_ref[t]                                 # [C, 1, Wo] f32
            r0 = row_base + kh * dilation
            c0 = kw * dilation
            if stride == 1:
                win = xpad_ref[:, pl.ds(r0, th), pl.ds(c0, Wo)]
            else:
                win = xpad_ref[:, pl.ds(r0, th, stride), pl.ds(c0, Wo, stride)]
            term = win.astype(jnp.float32) * tap            # sublane broadcast
            acc = term if acc is None else acc + term       # [C, th, Wo] f32

    # Single relayout per tile into the lane-dense pointwise / store layout.
    acc2d = acc.reshape(C, th * Wo)                         # [C, th*Wo]

    # ---- pointwise 1x1 conv --------------------------------------------------
    if pointwise_mxu:
        pw = pw_ref[...]                                    # [Cout, C]
        lhs = acc2d
        if pw.dtype == jnp.bfloat16:                        # bf16-native MXU
            lhs = lhs.astype(jnp.bfloat16)                  # (f32 accumulate)
        out = jnp.dot(pw, lhs, preferred_element_type=jnp.float32)
    else:
        # Small channel counts: C outer-product VPU FMAs over lane-dense rows;
        # the MXU systolic array would be almost entirely idle at these shapes.
        pwm = pw_ref[...].astype(jnp.float32)               # [Cout, C]
        out = None
        for c in range(C):
            term = pwm[:, c:c + 1] * acc2d[c:c + 1, :]      # [Cout,1]*[1,L]
            out = term if out is None else out + term       # [Cout, th*Wo]
    o_ref[0] = out.astype(o_ref.dtype)                      # lane-dense store


# ---------------------------------------------------------------------------
# Wrapper helpers
# ---------------------------------------------------------------------------
def _round_up(v, m):
    return ((v + m - 1) // m) * m


def _tpu_info():
    try:
        return pltpu.get_tpu_info()
    except Exception:
        return None


def _vmem_capacity_bytes(info):
    for attr in ("vmem_capacity_bytes", "vmem_bytes", "vmem_size_bytes"):
        v = getattr(info, attr, None) if info is not None else None
        if isinstance(v, int) and v > 0:
            return min(max(v, 32 * 1024 * 1024), 256 * 1024 * 1024)
    return 64 * 1024 * 1024        # conservative default (v7x physical VMEM)


def _num_tensorcores(info):
    for attr in ("num_tensorcores", "tensorcore_count", "num_cores",
                 "core_count"):
        v = getattr(info, attr, None) if info is not None else None
        if isinstance(v, int) and v > 0:
            return v
    return 1                       # conservative: v5e/v6e have one TensorCore


def _pick_tile_h(Ho, Wo, *, max_block_lanes, fixed_vmem, out_bytes_per_lane,
                 vmem_budget):
    """Largest row tile th dividing Ho whose flattened width th*Wo is a
    multiple of 128 (unmasked lane-dense stores) and fits the VMEM budget."""
    cands = [t for t in range(1, Ho + 1)
             if Ho % t == 0 and (t * Wo) % 128 == 0]
    good = [t for t in cands
            if t * Wo <= max_block_lanes
            and fixed_vmem + out_bytes_per_lane * t * Wo <= vmem_budget]
    if good:
        return max(good)
    if cands:
        return min(cands)
    # Fallback (awkward Ho/Wo): single full-height tile; stores become masked
    # (< 128 lanes) but the result stays correct.
    return Ho


def separable_conv2d(x, dw_weight, pw_weight, *, kernel_size=3, padding=1,
                     stride=1, dilation=1):
    """x: [N, C, H, W]; dw_weight: [C, 1, k, k]; pw_weight: [Cout, C, 1, 1]."""
    N, C, H, W = x.shape
    Cout = pw_weight.shape[0]
    k = kernel_size

    Ho = (H + 2 * padding - dilation * (k - 1) - 1) // stride + 1
    Wo = (W + 2 * padding - dilation * (k - 1) - 1) // stride + 1
    Hp, Wp = H + 2 * padding, W + 2 * padding

    xdsize = jnp.dtype(x.dtype).itemsize
    pointwise_mxu = (C * Cout) > _POINTWISE_FMA_MAX

    info = _tpu_info()
    vmem_cap = _vmem_capacity_bytes(info)
    num_tc = _num_tensorcores(info)

    # ---- per-generation VMEM budgeting (pick the largest lane-dense tile) ---
    xpad_vmem = C * _round_up(Hp, 8) * _round_up(Wp, 128) * xdsize
    in_vmem = 2 * C * _round_up(H, 8) * _round_up(W, 128) * xdsize
    dw_vmem = 2 * (k * k) * C * 8 * _round_up(Wo, 128) * 4
    pw_vmem = 2 * _round_up(Cout, 8) * _round_up(C, 128) * 4
    fixed_vmem = xpad_vmem + in_vmem + dw_vmem + pw_vmem
    out_bytes_per_lane = 2 * _round_up(Cout, 8) * xdsize     # double-buffered

    vmem_budget = max(8 * 1024 * 1024, int(vmem_cap * 0.45))
    max_block_lanes = 32768 if vmem_cap >= 96 * 1024 * 1024 else 8192

    th = _pick_tile_h(Ho, Wo, max_block_lanes=max_block_lanes,
                      fixed_vmem=fixed_vmem,
                      out_bytes_per_lane=out_bytes_per_lane,
                      vmem_budget=vmem_budget)
    HT = Ho // th

    # Refill the padded scratch per tile (tile axis "parallel") only when there
    # is a second TensorCore to feed and no batch parallelism; on 1-TC chips
    # (v5e/v6e) the tile axis stays "arbitrary" and the fill runs once per n.
    refill_every_tile = (N == 1 and HT > 1 and num_tc > 1)

    total_vmem = fixed_vmem + out_bytes_per_lane * th * Wo
    vmem_limit = max(32 * 1024 * 1024,
                     min(vmem_cap - 8 * 1024 * 1024,
                         total_vmem + 16 * 1024 * 1024))

    # ---- weight repacking (tiny, done once) ----------------------------------
    # Depthwise taps, lane-pre-broadcast so the kernel multiplies a [C,1,Wo]
    # slab per tap with no in-kernel relayout.
    dw_taps = jnp.transpose(dw_weight[:, 0, :, :].astype(jnp.float32),
                            (1, 2, 0)).reshape(k * k, C)       # [t, c]
    dw_b = jnp.broadcast_to(dw_taps[:, :, None, None], (k * k, C, 1, Wo))
    pw2d = pw_weight[:, :, 0, 0]                               # [Cout, C]

    kernel = functools.partial(
        _sepconv_kernel, k=k, stride=stride, dilation=dilation, pad=padding,
        H=H, W=W, Wo=Wo, C=C, th=th,
        pointwise_mxu=pointwise_mxu, refill_every_tile=refill_every_tile)

    flops = 2 * N * Ho * Wo * (C * k * k + C * Cout)
    bytes_accessed = int(x.size * xdsize + dw_b.size * 4
                         + pw2d.size * jnp.dtype(pw2d.dtype).itemsize
                         + N * Cout * Ho * Wo * xdsize)

    out_flat = pl.pallas_call(
        kernel,
        out_shape=jax.ShapeDtypeStruct((N, Cout, Ho * Wo), x.dtype),
        grid_spec=pltpu.PrefetchScalarGridSpec(
            num_scalar_prefetch=0,
            grid=(N, HT),
            in_specs=[
                pl.BlockSpec((1, C, H, W), lambda n, i: (n, 0, 0, 0)),
                pl.BlockSpec((k * k, C, 1, Wo), lambda n, i: (0, 0, 0, 0)),
                pl.BlockSpec((Cout, C), lambda n, i: (0, 0)),
            ],
            out_specs=pl.BlockSpec((1, Cout, th * Wo), lambda n, i: (n, 0, i)),
            scratch_shapes=[
                pltpu.VMEM((C, Hp, Wp), x.dtype),   # zero-padded image
            ],
        ),
        compiler_params=pltpu.CompilerParams(
            dimension_semantics=(
                "parallel", "parallel" if refill_every_tile else "arbitrary"),
            vmem_limit_bytes=int(vmem_limit),
        ),
        cost_estimate=pl.CostEstimate(flops=flops, transcendentals=0,
                                      bytes_accessed=bytes_accessed),
    )(x, dw_b, pw2d)

    # Contiguous split of the flattened spatial axis (cheap reshape, no transpose).
    return out_flat.reshape(N, Cout, Ho, Wo)


def _reference(x_nchw, dw_weight, pw_weight, *, padding, stride, dilation):
    """Pure-JAX reference matching PyTorch Conv2d semantics."""
    C = x_nchw.shape[1]
    y = lax.conv_general_dilated(
        x_nchw, dw_weight,
        window_strides=(stride, stride),
        padding=[(padding, padding), (padding, padding)],
        rhs_dilation=(dilation, dilation),
        dimension_numbers=("NCHW", "OIHW", "NCHW"),
        feature_group_count=C)
    y = lax.conv_general_dilated(
        y, pw_weight,
        window_strides=(1, 1), padding=[(0, 0), (0, 0)],
        dimension_numbers=("NCHW", "OIHW", "NCHW"))
    return y


if __name__ == "__main__":
    # Module config: SeparableConv2d(4, 8, kernel_size=3, padding=1), bias=False.
    N, Cin, H, W = 2, 4, 16, 16
    Cout, K = 8, 3

    key = jax.random.PRNGKey(0)
    kx, kd, kp = jax.random.split(key, 3)
    x = jax.random.normal(kx, (N, Cin, H, W), dtype=jnp.float32)
    dw_weight = jax.random.normal(kd, (Cin, 1, K, K), dtype=jnp.float32) * 0.1
    pw_weight = jax.random.normal(kp, (Cout, Cin, 1, 1), dtype=jnp.float32) * 0.1

    configs = [
        dict(kernel_size=K, padding=1, stride=1, dilation=1),   # module default
        dict(kernel_size=K, padding=2, stride=1, dilation=2),   # dilated variant
    ]
    for cfg in configs:
        out = separable_conv2d(x, dw_weight, pw_weight, **cfg)
        out = jax.block_until_ready(out)
        ref = _reference(x, dw_weight, pw_weight, padding=cfg["padding"],
                         stride=cfg["stride"], dilation=cfg["dilation"])
        np.testing.assert_allclose(np.asarray(out), np.asarray(ref),
                                   rtol=1e-4, atol=1e-4)

    print("KERNEL_OK")
</pallas_src>

<mosaic_0001>
module attributes {stable_mosaic.version = 11 : i64} {
  func.func @_sepconv_kernel(%arg0: i32, %arg1: i32, %arg2: memref<1x4x16x16xf32, #tpu.memory_space<vmem>>, %arg3: memref<9x4x1x16xf32, #tpu.memory_space<vmem>>, %arg4: memref<8x4xf32, #tpu.memory_space<vmem>>, %arg5: memref<1x8x256xf32, #tpu.memory_space<vmem>>, %arg6: memref<4x18x18xf32, #tpu.memory_space<vmem>>) attributes {dimension_semantics = [#tpu.dimension_semantics<parallel>, #tpu.dimension_semantics<arbitrary>], iteration_bounds = array<i64: 2, 1>, scalar_prefetch = 0 : i64, scratch_operands = 1 : i64, tpu.core_type = #tpu.core_type<tc>, window_params = [{transform_indices = @transform_0, window_bounds = array<i64: 1, 4, 16, 16>}, {pipeline_mode = #tpu.pipeline_mode<synchronous>, transform_indices = @transform_1, window_bounds = array<i64: 9, 4, 1, 16>}, {pipeline_mode = #tpu.pipeline_mode<synchronous>, transform_indices = @transform_2, window_bounds = array<i64: 8, 4>}, {transform_indices = @transform_3, window_bounds = array<i64: 1, 8, 256>}]} {
    %c0_i32 = arith.constant 0 : i32
    %0 = arith.cmpi eq, %arg1, %c0_i32 : i32
    %1 = arith.extui %0 : i1 to i32
    %c0_i32_0 = arith.constant 0 : i32
    %2 = arith.cmpi ne, %1, %c0_i32_0 : i32
    scf.if %2 {
      %cst = arith.constant 0.000000e+00 : f32
      %104 = vector.broadcast %cst : f32 to vector<4x1x18xf32>
      %cst_58 = arith.constant 0.000000e+00 : f32
      %105 = vector.broadcast %cst_58 : f32 to vector<4x16x1xf32>
      %c0_59 = arith.constant 0 : index
      %c0_60 = arith.constant 0 : index
      %c0_61 = arith.constant 0 : index
      %106 = vector.load %arg6[%c0_59, %c0_60, %c0_61] : memref<4x18x18xf32, #tpu.memory_space<vmem>>, vector<4x1x18xf32>
      tpu.vector_store %arg6[%c0_59, %c0_60, %c0_61], %104 {strides = array<i32>} : memref<4x18x18xf32, #tpu.memory_space<vmem>>, vector<4x1x18xf32>,
      %c0_62 = arith.constant 0 : index
      %c17 = arith.constant 17 : index
      %c0_63 = arith.constant 0 : index
      %107 = vector.load %arg6[%c0_62, %c17, %c0_63] : memref<4x18x18xf32, #tpu.memory_space<vmem>>, vector<4x1x18xf32>
      tpu.vector_store %arg6[%c0_62, %c17, %c0_63], %104 {strides = array<i32>} : memref<4x18x18xf32, #tpu.memory_space<vmem>>, vector<4x1x18xf32>,
      %c0_64 = arith.constant 0 : index
      %c1_65 = arith.constant 1 : index
      %c0_66 = arith.constant 0 : index
      %108 = vector.load %arg6[%c0_64, %c1_65, %c0_66] : memref<4x18x18xf32, #tpu.memory_space<vmem>>, vector<4x16x1xf32>
      tpu.vector_store %arg6[%c0_64, %c1_65, %c0_66], %105 {strides = array<i32>} : memref<4x18x18xf32, #tpu.memory_space<vmem>>, vector<4x16x1xf32>,
      %c0_67 = arith.constant 0 : index
      %c1_68 = arith.constant 1 : index
      %c17_69 = arith.constant 17 : index
      %109 = vector.load %arg6[%c0_67, %c1_68, %c17_69] : memref<4x18x18xf32, #tpu.memory_space<vmem>>, vector<4x16x1xf32>
      tpu.vector_store %arg6[%c0_67, %c1_68, %c17_69], %105 {strides = array<i32>} : memref<4x18x18xf32, #tpu.memory_space<vmem>>, vector<4x16x1xf32>,
      %c0_70 = arith.constant 0 : index
      %c0_71 = arith.constant 0 : index
      %c0_72 = arith.constant 0 : index
      %c0_73 = arith.constant 0 : index
      %110 = vector.load %arg2[%c0_70, %c0_71, %c0_72, %c0_73] : memref<1x4x16x16xf32, #tpu.memory_space<vmem>>, vector<1x4x16x16xf32>
      %111 = vector.shape_cast %110 : vector<1x4x16x16xf32> to vector<4x16x16xf32>
      %c0_74 = arith.constant 0 : index
      %c1_75 = arith.constant 1 : index
      %c1_76 = arith.constant 1 : index
      %112 = vector.load %arg6[%c0_74, %c1_75, %c1_76] : memref<4x18x18xf32, #tpu.memory_space<vmem>>, vector<4x16x16xf32>
      tpu.vector_store %arg6[%c0_74, %c1_75, %c1_76], %111 {strides = array<i32>} : memref<4x18x18xf32, #tpu.memory_space<vmem>>, vector<4x16x16xf32>,
    } else {
    }
    %c16_i32 = arith.constant 16 : i32
    %3 = arith.muli %arg1, %c16_i32 : i32
    %4 = tpu.assume_multiple %3, 16 : i32
    %c0 = arith.constant 0 : index
    %c0_1 = arith.constant 0 : index
    %c0_2 = arith.constant 0 : index
    %c0_3 = arith.constant 0 : index
    %5 = vector.load %arg3[%c0, %c0_1, %c0_2, %c0_3] : memref<9x4x1x16xf32, #tpu.memory_space<vmem>>, vector<1x4x1x16xf32>
    %6 = vector.shape_cast %5 : vector<1x4x1x16xf32> to vector<4x1x16xf32>
    %c0_i32_4 = arith.constant 0 : i32
    %7 = arith.addi %4, %c0_i32_4 : i32
    %c0_5 = arith.constant 0 : index
    %8 = arith.index_cast %7 : i32 to index
    %c0_6 = arith.constant 0 : index
    %9 = vector.load %arg6[%c0_5, %8, %c0_6] : memref<4x18x18xf32, #tpu.memory_space<vmem>>, vector<4x16x16xf32>
    %10 = vector.broadcast %6 : vector<4x1x16xf32> to vector<4x16x16xf32>
    %11 = arith.mulf %9, %10 : vector<4x16x16xf32>
    %c1 = arith.constant 1 : index
    %c0_7 = arith.constant 0 : index
    %c0_8 = arith.constant 0 : index
    %c0_9 = arith.constant 0 : index
    %12 = vector.load %arg3[%c1, %c0_7, %c0_8, %c0_9] : memref<9x4x1x16xf32, #tpu.memory_space<vmem>>, vector<1x4x1x16xf32>
    %13 = vector.shape_cast %12 : vector<1x4x1x16xf32> to vector<4x1x16xf32>
    %c0_i32_10 = arith.constant 0 : i32
    %14 = arith.addi %4, %c0_i32_10 : i32
    %c0_11 = arith.constant 0 : index
    %15 = arith.index_cast %14 : i32 to index
    %c1_12 = arith.constant 1 : index
    %16 = vector.load %arg6[%c0_11, %15, %c1_12] : memref<4x18x18xf32, #tpu.memory_space<vmem>>, vector<4x16x16xf32>
    %17 = vector.broadcast %13 : vector<4x1x16xf32> to vector<4x16x16xf32>
    %18 = arith.mulf %16, %17 : vector<4x16x16xf32>
    %19 = arith.addf %11, %18 : vector<4x16x16xf32>
    %c2 = arith.constant 2 : index
    %c0_13 = arith.constant 0 : index
    %c0_14 = arith.constant 0 : index
    %c0_15 = arith.constant 0 : index
    %20 = vector.load %arg3[%c2, %c0_13, %c0_14, %c0_15] : memref<9x4x1x16xf32, #tpu.memory_space<vmem>>, vector<1x4x1x16xf32>
    %21 = vector.shape_cast %20 : vector<1x4x1x16xf32> to vector<4x1x16xf32>
    %c0_i32_16 = arith.constant 0 : i32
    %22 = arith.addi %4, %c0_i32_16 : i32
    %c0_17 = arith.constant 0 : index
    %23 = arith.index_cast %22 : i32 to index
    %c2_18 = arith.constant 2 : index
    %24 = vector.load %arg6[%c0_17, %23, %c2_18] : memref<4x18x18xf32, #tpu.memory_space<vmem>>, vector<4x16x16xf32>
    %25 = vector.broadcast %21 : vector<4x1x16xf32> to vector<4x16x16xf32>
    %26 = arith.mulf %24, %25 : vector<4x16x16xf32>
    %27 = arith.addf %19, %26 : vector<4x16x16xf32>
    %c3 = arith.constant 3 : index
    %c0_19 = arith.constant 0 : index
    %c0_20 = arith.constant 0 : index
    %c0_21 = arith.constant 0 : index
    %28 = vector.load %arg3[%c3, %c0_19, %c0_20, %c0_21] : memref<9x4x1x16xf32, #tpu.memory_space<vmem>>, vector<1x4x1x16xf32>
    %29 = vector.shape_cast %28 : vector<1x4x1x16xf32> to vector<4x1x16xf32>
    %c1_i32 = arith.constant 1 : i32
    %30 = arith.addi %4, %c1_i32 : i32
    %c0_22 = arith.constant 0 : index
    %31 = arith.index_cast %30 : i32 to index
    %c0_23 = arith.constant 0 : index
    %32 = vector.load %arg6[%c0_22, %31, %c0_23] : memref<4x18x18xf32, #tpu.memory_space<vmem>>, vector<4x16x16xf32>
    %33 = vector.broadcast %29 : vector<4x1x16xf32> to vector<4x16x16xf32>
    %34 = arith.mulf %32, %33 : vector<4x16x16xf32>
    %35 = arith.addf %27, %34 : vector<4x16x16xf32>
    %c4 = arith.constant 4 : index
    %c0_24 = arith.constant 0 : index
    %c0_25 = arith.constant 0 : index
    %c0_26 = arith.constant 0 : index
    %36 = vector.load %arg3[%c4, %c0_24, %c0_25, %c0_26] : memref<9x4x1x16xf32, #tpu.memory_space<vmem>>, vector<1x4x1x16xf32>
    %37 = vector.shape_cast %36 : vector<1x4x1x16xf32> to vector<4x1x16xf32>
    %c1_i32_27 = arith.constant 1 : i32
    %38 = arith.addi %4, %c1_i32_27 : i32
    %c0_28 = arith.constant 0 : index
    %39 = arith.index_cast %38 : i32 to index
    %c1_29 = arith.constant 1 : index
    %40 = vector.load %arg6[%c0_28, %39, %c1_29] : memref<4x18x18xf32, #tpu.memory_space<vmem>>, vector<4x16x16xf32>
    %41 = vector.broadcast %37 : vector<4x1x16xf32> to vector<4x16x16xf32>
    %42 = arith.mulf %40, %41 : vector<4x16x16xf32>
    %43 = arith.addf %35, %42 : vector<4x16x16xf32>
    %c5 = arith.constant 5 : index
    %c0_30 = arith.constant 0 : index
    %c0_31 = arith.constant 0 : index
    %c0_32 = arith.constant 0 : index
    %44 = vector.load %arg3[%c5, %c0_30, %c0_31, %c0_32] : memref<9x4x1x16xf32, #tpu.memory_space<vmem>>, vector<1x4x1x16xf32>
    %45 = vector.shape_cast %44 : vector<1x4x1x16xf32> to vector<4x1x16xf32>
    %c1_i32_33 = arith.constant 1 : i32
    %46 = arith.addi %4, %c1_i32_33 : i32
    %c0_34 = arith.constant 0 : index
    %47 = arith.index_cast %46 : i32 to index
    %c2_35 = arith.constant 2 : index
    %48 = vector.load %arg6[%c0_34, %47, %c2_35] : memref<4x18x18xf32, #tpu.memory_space<vmem>>, vector<4x16x16xf32>
    %49 = vector.broadcast %45 : vector<4x1x16xf32> to vector<4x16x16xf32>
    %50 = arith.mulf %48, %49 : vector<4x16x16xf32>
    %51 = arith.addf %43, %50 : vector<4x16x16xf32>
    %c6 = arith.constant 6 : index
    %c0_36 = arith.constant 0 : index
    %c0_37 = arith.constant 0 : index
    %c0_38 = arith.constant 0 : index
    %52 = vector.load %arg3[%c6, %c0_36, %c0_37, %c0_38] : memref<9x4x1x16xf32, #tpu.memory_space<vmem>>, vector<1x4x1x16xf32>
    %53 = vector.shape_cast %52 : vector<1x4x1x16xf32> to vector<4x1x16xf32>
    %c2_i32 = arith.constant 2 : i32
    %54 = arith.addi %4, %c2_i32 : i32
    %c0_39 = arith.constant 0 : index
    %55 = arith.index_cast %54 : i32 to index
    %c0_40 = arith.constant 0 : index
    %56 = vector.load %arg6[%c0_39, %55, %c0_40] : memref<4x18x18xf32, #tpu.memory_space<vmem>>, vector<4x16x16xf32>
    %57 = vector.broadcast %53 : vector<4x1x16xf32> to vector<4x16x16xf32>
    %58 = arith.mulf %56, %57 : vector<4x16x16xf32>
    %59 = arith.addf %51, %58 : vector<4x16x16xf32>
    %c7 = arith.constant 7 : index
    %c0_41 = arith.constant 0 : index
    %c0_42 = arith.constant 0 : index
    %c0_43 = arith.constant 0 : index
    %60 = vector.load %arg3[%c7, %c0_41, %c0_42, %c0_43] : memref<9x4x1x16xf32, #tpu.memory_space<vmem>>, vector<1x4x1x16xf32>
    %61 = vector.shape_cast %60 : vector<1x4x1x16xf32> to vector<4x1x16xf32>
    %c2_i32_44 = arith.constant 2 : i32
    %62 = arith.addi %4, %c2_i32_44 : i32
    %c0_45 = arith.constant 0 : index
    %63 = arith.index_cast %62 : i32 to index
    %c1_46 = arith.constant 1 : index
    %64 = vector.load %arg6[%c0_45, %63, %c1_46] : memref<4x18x18xf32, #tpu.memory_space<vmem>>, vector<4x16x16xf32>
    %65 = vector.broadcast %61 : vector<4x1x16xf32> to vector<4x16x16xf32>
    %66 = arith.mulf %64, %65 : vector<4x16x16xf32>
    %67 = arith.addf %59, %66 : vector<4x16x16xf32>
    %c8 = arith.constant 8 : index
    %c0_47 = arith.constant 0 : index
    %c0_48 = arith.constant 0 : index
    %c0_49 = arith.constant 0 : index
    %68 = vector.load %arg3[%c8, %c0_47, %c0_48, %c0_49] : memref<9x4x1x16xf32, #tpu.memory_space<vmem>>, vector<1x4x1x16xf32>
    %69 = vector.shape_cast %68 : vector<1x4x1x16xf32> to vector<4x1x16xf32>
    %c2_i32_50 = arith.constant 2 : i32
    %70 = arith.addi %4, %c2_i32_50 : i32
    %c0_51 = arith.constant 0 : index
    %71 = arith.index_cast %70 : i32 to index
    %c2_52 = arith.constant 2 : index
    %72 = vector.load %arg6[%c0_51, %71, %c2_52] : memref<4x18x18xf32, #tpu.memory_space<vmem>>, vector<4x16x16xf32>
    %73 = vector.broadcast %69 : vector<4x1x16xf32> to vector<4x16x16xf32>
    %74 = arith.mulf %72, %73 : vector<4x16x16xf32>
    %75 = arith.addf %67, %74 : vector<4x16x16xf32>
    %76 = vector.shape_cast %75 : vector<4x16x16xf32> to vector<4x256xf32>
    %c0_53 = arith.constant 0 : index
    %c0_54 = arith.constant 0 : index
    %77 = vector.load %arg4[%c0_53, %c0_54] : memref<8x4xf32, #tpu.memory_space<vmem>>, vector<8x4xf32>
    %78 = vector.extract_strided_slice %77 {offsets = [0, 0], sizes = [8, 1], strides = [1, 1]} : vector<8x4xf32> to vector<8x1xf32>
    %79 = vector.extract_strided_slice %76 {offsets = [0, 0], sizes = [1, 256], strides = [1, 1]} : vector<4x256xf32> to vector<1x256xf32>
    %80 = vector.broadcast %78 : vector<8x1xf32> to vector<8x256xf32>
    %81 = vector.broadcast %79 : vector<1x256xf32> to vector<8x256xf32>
    %82 = arith.mulf %80, %81 : vector<8x256xf32>
    %83 = vector.extract_strided_slice %77 {offsets = [0, 1], sizes = [8, 1], strides = [1, 1]} : vector<8x4xf32> to vector<8x1xf32>
    %84 = vector.extract_strided_slice %76 {offsets = [1, 0], sizes = [1, 256], strides = [1, 1]} : vector<4x256xf32> to vector<1x256xf32>
    %85 = vector.broadcast %83 : vector<8x1xf32> to vector<8x256xf32>
    %86 = vector.broadcast %84 : vector<1x256xf32> to vector<8x256xf32>
    %87 = arith.mulf %85, %86 : vector<8x256xf32>
    %88 = arith.addf %82, %87 : vector<8x256xf32>
    %89 = vector.extract_strided_slice %77 {offsets = [0, 2], sizes = [8, 1], strides = [1, 1]} : vector<8x4xf32> to vector<8x1xf32>
    %90 = vector.extract_strided_slice %76 {offsets = [2, 0], sizes = [1, 256], strides = [1, 1]} : vector<4x256xf32> to vector<1x256xf32>
    %91 = vector.broadcast %89 : vector<8x1xf32> to vector<8x256xf32>
    %92 = vector.broadcast %90 : vector<1x256xf32> to vector<8x256xf32>
    %93 = arith.mulf %91, %92 : vector<8x256xf32>
    %94 = arith.addf %88, %93 : vector<8x256xf32>
    %95 = vector.extract_strided_slice %77 {offsets = [0, 3], sizes = [8, 1], strides = [1, 1]} : vector<8x4xf32> to vector<8x1xf32>
    %96 = vector.extract_strided_slice %76 {offsets = [3, 0], sizes = [1, 256], strides = [1, 1]} : vector<4x256xf32> to vector<1x256xf32>
    %97 = vector.broadcast %95 : vector<8x1xf32> to vector<8x256xf32>
    %98 = vector.broadcast %96 : vector<1x256xf32> to vector<8x256xf32>
    %99 = arith.mulf %97, %98 : vector<8x256xf32>
    %100 = arith.addf %94, %99 : vector<8x256xf32>
    %c0_55 = arith.constant 0 : index
    %c0_56 = arith.constant 0 : index
    %c0_57 = arith.constant 0 : index
    %101 = vector.load %arg5[%c0_55, %c0_56, %c0_57] : memref<1x8x256xf32, #tpu.memory_space<vmem>>, vector<1x8x256xf32>
    %102 = vector.shape_cast %101 : vector<1x8x256xf32> to vector<8x256xf32>
    %103 = vector.shape_cast %100 : vector<8x256xf32> to vector<1x8x256xf32>
    tpu.vector_store %arg5[%c0_55, %c0_56, %c0_57], %103 {strides = array<i32>} : memref<1x8x256xf32, #tpu.memory_space<vmem>>, vector<1x8x256xf32>,
    return
  }
  func.func @transform_0(%arg0: i32, %arg1: i32) -> (i32, i32, i32, i32) {
    %c0_i32 = arith.constant 0 : i32
    %c0_i32_0 = arith.constant 0 : i32
    %c0_i32_1 = arith.constant 0 : i32
    %c0_i32_2 = arith.constant 0 : i32
    return %arg0, %c0_i32, %c0_i32_0, %c0_i32_1 : i32, i32, i32, i32
  }
  func.func @transform_1(%arg0: i32, %arg1: i32) -> (i32, i32, i32, i32) {
    %c0_i32 = arith.constant 0 : i32
    %c0_i32_0 = arith.constant 0 : i32
    %c0_i32_1 = arith.constant 0 : i32
    %c0_i32_2 = arith.constant 0 : i32
    %c0_i32_3 = arith.constant 0 : i32
    return %c0_i32, %c0_i32_0, %c0_i32_1, %c0_i32_2 : i32, i32, i32, i32
  }
  func.func @transform_2(%arg0: i32, %arg1: i32) -> (i32, i32) {
    %c0_i32 = arith.constant 0 : i32
    %c0_i32_0 = arith.constant 0 : i32
    %c0_i32_1 = arith.constant 0 : i32
    return %c0_i32, %c0_i32_0 : i32, i32
  }
  func.func @transform_3(%arg0: i32, %arg1: i32) -> (i32, i32, i32) {
    %c0_i32 = arith.constant 0 : i32
    %c0_i32_0 = arith.constant 0 : i32
    return %arg0, %c0_i32, %arg1 : i32, i32, i32
  }
}

</mosaic_0001>

<llo_original>
// kernel: tpu_custom_call.1
$region0: #{tpu_custom_call.1}
  #allocation0 [shape = 'u32[]', space=smem, size = 0x4, offset = 0x4, fixed_abs, tag = 'smem constant byte address 0x4 - core index']
  #allocation1 [shape = 'u32[144,128]{1,0:T(1,128)}', space=vmem, size = 0x12000, scoped, tag = 'internal scratch']
  #allocation2 [shape = 'f32[4,18,18]{2,1,0:T(8,128)}', space=vmem, size = 0xc000, scoped, tag = 'scratch operand']
  %s0 = inlined_call_operand.hbm [shape: f32[2,4,16,16], index: 0, kind: input, shape index: {}]
  %s1 = inlined_call_operand.hbm [shape: f32[9,4,1,16], index: 1, kind: input, shape index: {}]
  %s2 = inlined_call_operand.vmem [shape: f32[8,4], index: 2, kind: input, shape index: {}]
  %s3 = inlined_call_operand.hbm [shape: f32[2,8,256], index: 3, kind: output, shape index: {}]
  %s4 = sld [smem:[#allocation0]]
  $region57: #{tpu_custom_call.1} parent=0
    _
  %s6 = ssub.s32 1, %s4
  %s7 = scalar_select 0, %s6, %s4
  $region1: #{tpu_custom_call.1} parent=0
    #allocation3 [shape = 'u8[65536]{0}', space=vmem, size = 0x10000, scoped, tag = 'input window, operand 0']
    #allocation4 [shape = 's32[2]{0}', space=sflag, size = 0x8, scoped, tag = 'scoped memory for tpu_custom_call.1']
    #allocation5 [shape = 's32[2]{0}', space=sflag, size = 0x8, scoped, tag = 'scoped memory for tpu_custom_call.1']
    #allocation6 [shape = 'u8[18432]{0}', space=vmem, size = 0x4800, scoped, tag = 'input window, operand 1, single buffered']
    #allocation7 [shape = 's32[1]{0}', space=sflag, size = 0x4, scoped, tag = 'scoped memory for tpu_custom_call.1']
    #allocation8 [shape = 'u8[16384]{0}', space=vmem, size = 0x4000, scoped, tag = 'output window, operand 0']
    %8 = vsyncpa [#allocation4], 0
    %s9 = scalar_lea.sflag [#allocation4], 1
    %10 = vsyncpa %s9, 0
    %11 = vsyncpa [#allocation7], 0
    %12 = vsyncpa [#allocation5], 0
    %s13 = scalar_lea.sflag [#allocation5], 1
    %14 = vsyncpa %s13, 0
    loop: start=0, step=1, limit=4
    $region2: #{tpu_custom_call.1} parent=1 // loop_pre_header
      _
    $region3: #{tpu_custom_call.1} parent=1 // loop_header
      %s16 = sphi 0, %s20
      %p17 = scmp.ge.s32.totalorder %s16, 4
      %s23 = sphi 0, %s35
      %s24 = sphi 0, %s31
      %s25 = sphi 0, %s23
      %s26 = sphi 0, %s24
      %s27 = sphi 0, %s25
      %s28 = sphi 0, %s26
      %s38 = sphi 0, %s40
      %s41 = sphi 0, %s38
      %s42 = sphi 0, %s41
      %s58 = sphi 0, %s42
      %s62 = sphi 0, %s62
      %s64 = sphi 0, %s62
      %s65 = sphi 0, %s64
      %s79 = sphi 0, %s65
      %s83 = sphi 0, %s83
      %s85 = sphi 0, %s83
      %s86 = sphi 0, %s85
      %s100 = sphi 0, %s86
      %s108 = sphi 0, %s110
      %s111 = sphi 0, %s108
      %s112 = sphi 0, %s111
      %s128 = sphi 0, %s112
    $region4: #{tpu_custom_call.1} parent=1 // loop_header_branch
      %19 = sbr.rel (%p17) target = $region8
    $region5: #{tpu_custom_call.1} parent=1 // loop_body
      %s21 = ssub.s32 %s16, 1
      %s22 = ssub.s32 %s16, 2
      %s29 = sadd.s32 1, %s24
      %p30 = scmp.ge.s32.totalorder %s29, 1
      %s31 = scalar_select %p30, 0, %s29
      %s32 = sadd.s32 1, %s23
      %s33 = scalar_select %p30, %s32, %s23
      %p34 = scmp.ge.s32.totalorder %s33, 2
      %s35 = scalar_select %p34, 0, %s33
      %s36 = ssub.s32 %s23, %s35
      %p37 = scmp.eq.s32.totalorder %s36, 0
      %s39 = sadd.s32 %s38, 1
      %s40 = scalar_select %p37, %s38, %s39
      %p43 = pneg %p37
      %p44 = scmp.eq.s32.totalorder %s16, 1
      %p45 = por %p43, %p44
      %p46 = scmp.ne.s32.totalorder %s38, %s41
      %p47 = scmp.eq.s32.totalorder %s16, 0
      %p48 = por %p46, %p47
      %p49 = scmp.ne.s32.totalorder %s38, %s41
      %p50 = scmp.eq.s32.totalorder %s21, 1
      %p51 = por %p49, %p50
      %p52 = scmp.ne.s32.totalorder %s41, %s42
      %p53 = scmp.eq.s32.totalorder %s21, 0
      %p54 = por %p52, %p53
      %p55 = scmp.ne.s32.totalorder %s41, %s42
      %p56 = scmp.eq.s32.totalorder %s22, 1
      %p57 = por %p55, %p56
      %p59 = scmp.ne.s32.totalorder %s42, %s58
      %p60 = scmp.eq.s32.totalorder %s22, 0
      %p61 = por %p59, %p60
      %s63 = sadd.s32 %s62, 1
      %p66 = scmp.eq.s32.totalorder %s16, 1
      %p67 = scmp.ne.s32.totalorder %s62, %s64
      %p68 = scmp.eq.s32.totalorder %s16, 0
      %p69 = por %p67, %p68
      %p70 = scmp.ne.s32.totalorder %s62, %s64
      %p71 = scmp.eq.s32.totalorder %s21, 1
      %p72 = por %p70, %p71
      %p73 = scmp.ne.s32.totalorder %s64, %s65
      %p74 = scmp.eq.s32.totalorder %s21, 0
      %p75 = por %p73, %p74
      %p76 = scmp.ne.s32.totalorder %s64, %s65
      %p77 = scmp.eq.s32.totalorder %s22, 1
      %p78 = por %p76, %p77
      %p80 = scmp.ne.s32.totalorder %s65, %s79
      %p81 = scmp.eq.s32.totalorder %s22, 0
      %p82 = por %p80, %p81
      %s84 = sadd.s32 %s83, 1
      %p87 = scmp.eq.s32.totalorder %s16, 1
      %p88 = scmp.ne.s32.totalorder %s83, %s85
      %p89 = scmp.eq.s32.totalorder %s16, 0
      %p90 = por %p88, %p89
      %p91 = scmp.ne.s32.totalorder %s83, %s85
      %p92 = scmp.eq.s32.totalorder %s21, 1
      %p93 = por %p91, %p92
      %p94 = scmp.ne.s32.totalorder %s85, %s86
      %p95 = scmp.eq.s32.totalorder %s21, 0
      %p96 = por %p94, %p95
      %p97 = scmp.ne.s32.totalorder %s85, %s86
      %p98 = scmp.eq.s32.totalorder %s22, 1
      %p99 = por %p97, %p98
      %p101 = scmp.ne.s32.totalorder %s86, %s100
      %p102 = scmp.eq.s32.totalorder %s22, 0
      %p103 = por %p101, %p102
      %s104 = ssub.s32 %s23, %s35
      %s105 = ssub.s32 %s24, %s31
      %s106 = sor.u32 %s104, %s105
      %p107 = scmp.eq.s32.totalorder %s106, 0
      %s109 = sadd.s32 %s108, 1
      %s110 = scalar_select %p107, %s108, %s109
      %p113 = pneg %p107
      %p114 = scmp.eq.s32.totalorder %s16, 1
      %p115 = por %p113, %p114
      %p116 = scmp.ne.s32.totalorder %s108, %s111
      %p117 = scmp.eq.s32.totalorder %s16, 0
      %p118 = por %p116, %p117
      %p119 = scmp.ne.s32.totalorder %s108, %s111
      %p120 = scmp.eq.s32.totalorder %s21, 1
      %p121 = por %p119, %p120
      %p122 = scmp.ne.s32.totalorder %s111, %s112
      %p123 = scmp.eq.s32.totalorder %s21, 0
      %p124 = por %p122, %p123
      %p125 = scmp.ne.s32.totalorder %s111, %s112
      %p126 = scmp.eq.s32.totalorder %s22, 1
      %p127 = por %p125, %p126
      %p129 = scmp.ne.s32.totalorder %s112, %s128
      %p130 = scmp.eq.s32.totalorder %s22, 0
      %p131 = por %p129, %p130
      %p132 = scmp.le.s32.totalorder 1, %s16
      %p133 = scmp.lt.s32.totalorder %s16, 3
      %p134 = pnand %p132, %p133
      %p135 = pneg %p134
      // Predicated region
      $region9: #{tpu_custom_call.1} parent=5 // pred_check
        _
      $region10: #{tpu_custom_call.1} parent=5 // pred_check_branch
        %137 = sbr.rel (%p134) target = $region12
      $region11: #{tpu_custom_call.1} parent=5 // pred_region
        %s138 = ssub.s32 %s16, 1
        // Predicated region
        $region13: #{tpu_custom_call.1} parent=11 // pred_check
          %p139 = pneg %p75
        $region14: #{tpu_custom_call.1} parent=11 // pred_check_branch
          %141 = sbr.rel (%p139) target = $region16
        $region15: #{tpu_custom_call.1} parent=11 // pred_region
          %s143 = ssub.s32 576, 576
          %144 = vsyncadd [#allocation7], %s143
          %s145 = sshll.u32 [#allocation6], 4
          %s146 = int_to_ptr.vmem [resolvable:$true] %s145
          %151 = dma.hbm_to_vmem [thread:$0]  %s1, 576, %s146, [#allocation7], 16, 16, 1
        $region16: #{tpu_custom_call.1} parent=11 // pred_fallthru
          _
        // Predicated region
        $region17: #{tpu_custom_call.1} parent=11 // pred_check
          %p152 = pneg %p96
        $region18: #{tpu_custom_call.1} parent=11 // pred_check_branch
          %154 = sbr.rel (%p152) target = $region20
        $region19: #{tpu_custom_call.1} parent=11 // pred_region
          _
        $region20: #{tpu_custom_call.1} parent=11 // pred_fallthru
          _
      $region12: #{tpu_custom_call.1} parent=5 // pred_fallthru
        _
      %p155 = scmp.lt.s32.totalorder %s16, 2
      // Predicated region
      $region21: #{tpu_custom_call.1} parent=5 // pred_check
        %p156 = pneg %p155
      $region22: #{tpu_custom_call.1} parent=5 // pred_check_branch
        %158 = sbr.rel (%p156) target = $region24
      $region23: #{tpu_custom_call.1} parent=5 // pred_region
        // Predicated region
        $region25: #{tpu_custom_call.1} parent=23 // pred_check
          %p159 = pneg %p48
        $region26: #{tpu_custom_call.1} parent=23 // pred_check_branch
          %161 = sbr.rel (%p159) target = $region28
        $region27: #{tpu_custom_call.1} parent=23 // pred_region
          %s162 = sand.u32 %s38, 1
          %s163 = scalar_lea.sflag [#allocation4], %s162
          %s164 = sand.u32 %s38, 1
          %s165 = smul.addr %s164, 64
          %s166 = scalar_lea.vmem [#allocation3], %s165
          %s168 = ssub.s32 1024, 1024
          %169 = vsyncadd %s163, %s168
          %s170 = smul.addr %s23, 8
          %s171 = smul.addr %s170, 128
          %s172 = scalar_lea.hbm %s0, %s171
          %s173 = sshll.u32 %s166, 4
          %s174 = int_to_ptr.vmem [resolvable:$true] %s173
          %179 = dma.hbm_to_vmem [thread:$0]  %s172, 1024, %s174, %s163, 128, 128, 8
        $region28: #{tpu_custom_call.1} parent=23 // pred_fallthru
          _
      $region24: #{tpu_custom_call.1} parent=5 // pred_fallthru
        _
      %p180 = scmp.le.s32.totalorder 1, %s16
      %p181 = scmp.lt.s32.totalorder %s16, 3
      %p182 = pnand %p180, %p181
      %p183 = pneg %p182
      // Predicated region
      $region29: #{tpu_custom_call.1} parent=5 // pred_check
        _
      $region30: #{tpu_custom_call.1} parent=5 // pred_check_branch
        %185 = sbr.rel (%p182) target = $region32
      $region31: #{tpu_custom_call.1} parent=5 // pred_region
        %s186 = ssub.s32 %s16, 1
        %s187 = sand.u32 %s41, 1
        %s188 = scalar_lea.sflag [#allocation4], %s187
        %s189 = sand.u32 %s41, 1
        %s190 = smul.addr %s189, 64
        %s191 = scalar_lea.vmem [#allocation3], %s190
        // Predicated region
        $region33: #{tpu_custom_call.1} parent=31 // pred_check
          %p192 = pneg %p54
        $region34: #{tpu_custom_call.1} parent=31 // pred_check_branch
          %194 = sbr.rel (%p192) target = $region36
        $region35: #{tpu_custom_call.1} parent=31 // pred_region
          %195 = dma.done %s188, 1024
        $region36: #{tpu_custom_call.1} parent=31 // pred_fallthru
          _
        // Predicated region
        $region37: #{tpu_custom_call.1} parent=31 // pred_check
          %p196 = pneg %p75
        $region38: #{tpu_custom_call.1} parent=31 // pred_check_branch
          %198 = sbr.rel (%p196) target = $region40
        $region39: #{tpu_custom_call.1} parent=31 // pred_region
          %199 = dma.done [#allocation7], 576
        $region40: #{tpu_custom_call.1} parent=31 // pred_fallthru
          _
        %s200 = sand.u32 %s41, 1
        %s201 = scalar_lea.sflag [#allocation4], %s200
        %s202 = sand.u32 %s41, 1
        %s203 = smul.addr %s202, 64
        %s204 = scalar_lea.vmem [#allocation3], %s203
        %p205 = pneg %p54
        %p206 = pneg %p51
        %p207 = pneg %p75
        %p208 = pneg %p72
        %p209 = pneg %p96
        %p210 = pneg %p93
        %p211 = pneg %p124
        %p212 = pneg %p121
        %s213 = sand.u32 %s111, 1
        %s214 = scalar_lea.sflag [#allocation5], %s213
        %s215 = sand.u32 %s111, 1
        %s216 = smul.addr %s215, 16
        %s217 = scalar_lea.vmem [#allocation8], %s216
        %s218 = smul.u32 2, %s26
        %p219 = scmp.eq.s32.totalorder %s26, 0
        // Predicated region
        $region41: #{tpu_custom_call.1} parent=31 // pred_check
          %p220 = pneg %p219
        $region42: #{tpu_custom_call.1} parent=31 // pred_check_branch
          %222 = sbr.rel (%p220) target = $region44
        $region43: #{tpu_custom_call.1} parent=31 // pred_region
          %vm223 = vcmask 139264
          %224 = vst.msk [vmem:[#allocation2] sm:$0x1] %vm223, 0.0
          %225 = vst.msk [vmem:[#allocation2 + $0x18] sm:$0x1] %vm223, 0.0
          %226 = vst.msk [vmem:[#allocation2 + $0x30] sm:$0x1] %vm223, 0.0
          %227 = vst.msk [vmem:[#allocation2 + $0x48] sm:$0x1] %vm223, 0.0
          %228 = vst.msk [vmem:[#allocation2 + $0x11] sm:$0x1] %vm223, 0.0
          %229 = vst.msk [vmem:[#allocation2 + $0x29] sm:$0x1] %vm223, 0.0
          %230 = vst.msk [vmem:[#allocation2 + $0x41] sm:$0x1] %vm223, 0.0
          %231 = vst.msk [vmem:[#allocation2 + $0x59] sm:$0x1] %vm223, 0.0
          %vm232 = vcmask 7168
          %233 = vst.msk [vmem:[#allocation2 + $0x1] sm:$0xff] %vm232, 0.0
          %234 = vst.msk [vmem:[#allocation2 + $0x9] sm:$0xff] %vm232, 0.0
          %235 = vst.msk [vmem:[#allocation2 + $0x19] sm:$0xff] %vm232, 0.0
          %236 = vst.msk [vmem:[#allocation2 + $0x21] sm:$0xff] %vm232, 0.0
          %237 = vst.msk [vmem:[#allocation2 + $0x31] sm:$0xff] %vm232, 0.0
          %238 = vst.msk [vmem:[#allocation2 + $0x39] sm:$0xff] %vm232, 0.0
          %239 = vst.msk [vmem:[#allocation2 + $0x49] sm:$0xff] %vm232, 0.0
          %240 = vst.msk [vmem:[#allocation2 + $0x51] sm:$0xff] %vm232, 0.0
          %vm241 = vcmask 146568
          %242 = vst.msk [vmem:[#allocation2 + $0x1] sm:$0xff] %vm241, 0.0
          %243 = vst.msk [vmem:[#allocation2 + $0x9] sm:$0xff] %vm241, 0.0
          %244 = vst.msk [vmem:[#allocation2 + $0x19] sm:$0xff] %vm241, 0.0
          %245 = vst.msk [vmem:[#allocation2 + $0x21] sm:$0xff] %vm241, 0.0
          %246 = vst.msk [vmem:[#allocation2 + $0x31] sm:$0xff] %vm241, 0.0
          %247 = vst.msk [vmem:[#allocation2 + $0x39] sm:$0xff] %vm241, 0.0
          %248 = vst.msk [vmem:[#allocation2 + $0x49] sm:$0xff] %vm241, 0.0
          %249 = vst.msk [vmem:[#allocation2 + $0x51] sm:$0xff] %vm241, 0.0
          %v250 = vld [vmem:[%s191] sm:$0xff]
          %v251 = vld [vmem:[%s191 + $0x8] sm:$0xff]
          %v252 = vld [vmem:[%s191 + $0x10] sm:$0xff]
          %v253 = vld [vmem:[%s191 + $0x18] sm:$0xff]
          %v254 = vld [vmem:[%s191 + $0x20] sm:$0xff]
          %v255 = vld [vmem:[%s191 + $0x28] sm:$0xff]
          %v256 = vld [vmem:[%s191 + $0x30] sm:$0xff]
          %v257 = vld [vmem:[%s191 + $0x38] sm:$0xff]
          %266 = vrot.lane.b32.xlu0 %v250, 1
          %v267 = vpop.permute.xlu0 %266
          %268 = vrot.lane.b32.xlu0 %v251, 1
          %v269 = vpop.permute.xlu0 %268
          %270 = vrot.lane.b32.xlu0 %v252, 1
          %v271 = vpop.permute.xlu0 %270
          %272 = vrot.lane.b32.xlu0 %v253, 1
          %v273 = vpop.permute.xlu0 %272
          %274 = vrot.lane.b32.xlu0 %v254, 1
          %v275 = vpop.permute.xlu0 %274
          %276 = vrot.lane.b32.xlu0 %v255, 1
          %v277 = vpop.permute.xlu0 %276
          %278 = vrot.lane.b32.xlu0 %v256, 1
          %v279 = vpop.permute.xlu0 %278
          %280 = vrot.lane.b32.xlu0 %v257, 1
          %v281 = vpop.permute.xlu0 %280
          %vm290 = vcmask 138248
          %291 = vst.msk [vmem:[#allocation2 + $0x1] sm:$0xff] %vm290, %v267
          %292 = vst.msk [vmem:[#allocation2 + $0x9] sm:$0xff] %vm290, %v269
          %293 = vst.msk [vmem:[#allocation2 + $0x19] sm:$0xff] %vm290, %v271
          %294 = vst.msk [vmem:[#allocation2 + $0x21] sm:$0xff] %vm290, %v273
          %295 = vst.msk [vmem:[#allocation2 + $0x31] sm:$0xff] %vm290, %v275
          %296 = vst.msk [vmem:[#allocation2 + $0x39] sm:$0xff] %vm290, %v277
          %297 = vst.msk [vmem:[#allocation2 + $0x49] sm:$0xff] %vm290, %v279
          %298 = vst.msk [vmem:[#allocation2 + $0x51] sm:$0xff] %vm290, %v281
        $region44: #{tpu_custom_call.1} parent=31 // pred_fallthru
          _
        %s299 = smul.u32 %s26, 16
        %v300 = vld [vmem:[#allocation6] sm:$0x1]
        %v301 = vld [vmem:[#allocation6 + $0x1] sm:$0x1]
        %v302 = vld [vmem:[#allocation6 + $0x2] sm:$0x1]
        %v303 = vld [vmem:[#allocation6 + $0x3] sm:$0x1]
        %s304 = scalar_lea.vmem [#allocation2], %s299
        %v305 = vld [vmem:[%s304] sm:$0xff]
        %v306 = vld [vmem:[%s304 + $0x8] sm:$0xff]
        %v307 = vld [vmem:[%s304 + $0x18] sm:$0xff]
        %v308 = vld [vmem:[%s304 + $0x20] sm:$0xff]
        %v309 = vld [vmem:[%s304 + $0x30] sm:$0xff]
        %v310 = vld [vmem:[%s304 + $0x38] sm:$0xff]
        %v311 = vld [vmem:[%s304 + $0x48] sm:$0xff]
        %v312 = vld [vmem:[%s304 + $0x50] sm:$0xff]
        %v317 = vlaneseq
        %v318 = vshrl.u32 %v317, 7
        %v319 = vsub.s32 0, %v318
        %v320 = vrot.slane %v300, %v319
        %v321 = vlaneseq
        %v322 = vshrl.u32 %v321, 7
        %v323 = vsub.s32 0, %v322
        %v324 = vrot.slane %v301, %v323
        %v325 = vlaneseq
        %v326 = vshrl.u32 %v325, 7
        %v327 = vsub.s32 0, %v326
        %v328 = vrot.slane %v302, %v327
        %v329 = vlaneseq
        %v330 = vshrl.u32 %v329, 7
        %v331 = vsub.s32 0, %v330
        %v332 = vrot.slane %v303, %v331
        %v337 = vmul.f32 %v305, %v320
        %v338 = vmul.f32 %v306, %v320
        %v339 = vmul.f32 %v307, %v324
        %v340 = vmul.f32 %v308, %v324
        %v341 = vmul.f32 %v309, %v328
        %v342 = vmul.f32 %v310, %v328
        %v343 = vmul.f32 %v311, %v332
        %v344 = vmul.f32 %v312, %v332
        %s345 = scalar_lea.vmem [#allocation6], 4
        %v346 = vld [vmem:[%s345] sm:$0x1]
        %v347 = vld [vmem:[%s345 + $0x1] sm:$0x1]
        %v348 = vld [vmem:[%s345 + $0x2] sm:$0x1]
        %v349 = vld [vmem:[%s345 + $0x3] sm:$0x1]
        %v354 = vlaneseq
        %v355 = vshrl.u32 %v354, 7
        %v356 = vsub.s32 0, %v355
        %v357 = vrot.slane %v346, %v356
        %v358 = vlaneseq
        %v359 = vshrl.u32 %v358, 7
        %v360 = vsub.s32 0, %v359
        %v361 = vrot.slane %v347, %v360
        %v362 = vlaneseq
        %v363 = vshrl.u32 %v362, 7
        %v364 = vsub.s32 0, %v363
        %v365 = vrot.slane %v348, %v364
        %v366 = vlaneseq
        %v367 = vshrl.u32 %v366, 7
        %v368 = vsub.s32 0, %v367
        %v369 = vrot.slane %v349, %v368
        %370 = vrot.lane.b32.xlu0 %v357, 1
        %v371 = vpop.permute.xlu0 %370
        %372 = vrot.lane.b32.xlu0 %v361, 1
        %v373 = vpop.permute.xlu0 %372
        %374 = vrot.lane.b32.xlu0 %v365, 1
        %v375 = vpop.permute.xlu0 %374
        %376 = vrot.lane.b32.xlu0 %v369, 1
        %v377 = vpop.permute.xlu0 %376
        %v382 = vmul.f32 %v305, %v371
        %v383 = vmul.f32 %v306, %v371
        %v384 = vmul.f32 %v307, %v373
        %v385 = vmul.f32 %v308, %v373
        %v386 = vmul.f32 %v309, %v375
        %v387 = vmul.f32 %v310, %v375
        %v388 = vmul.f32 %v311, %v377
        %v389 = vmul.f32 %v312, %v377
        %398 = vrot.lane.b32.xlu0 %v382, 127
        %v399 = vpop.permute.xlu0 %398
        %400 = vrot.lane.b32.xlu0 %v383, 127
        %v401 = vpop.permute.xlu0 %400
        %402 = vrot.lane.b32.xlu0 %v384, 127
        %v403 = vpop.permute.xlu0 %402
        %404 = vrot.lane.b32.xlu0 %v385, 127
        %v405 = vpop.permute.xlu0 %404
        %406 = vrot.lane.b32.xlu0 %v386, 127
        %v407 = vpop.permute.xlu0 %406
        %408 = vrot.lane.b32.xlu0 %v387, 127
        %v409 = vpop.permute.xlu0 %408
        %410 = vrot.lane.b32.xlu0 %v388, 127
        %v411 = vpop.permute.xlu0 %410
        %412 = vrot.lane.b32.xlu0 %v389, 127
        %v413 = vpop.permute.xlu0 %412
        %v422 = vadd.f32 %v337, %v399
        %v423 = vadd.f32 %v338, %v401
        %v424 = vadd.f32 %v339, %v403
        %v425 = vadd.f32 %v340, %v405
        %v426 = vadd.f32 %v341, %v407
        %v427 = vadd.f32 %v342, %v409
        %v428 = vadd.f32 %v343, %v411
        %v429 = vadd.f32 %v344, %v413
        %s430 = scalar_lea.vmem [#allocation6], 8
        %v431 = vld [vmem:[%s430] sm:$0x1]
        %v432 = vld [vmem:[%s430 + $0x1] sm:$0x1]
        %v433 = vld [vmem:[%s430 + $0x2] sm:$0x1]
        %v434 = vld [vmem:[%s430 + $0x3] sm:$0x1]
        %v439 = vlaneseq
        %v440 = vshrl.u32 %v439, 7
        %v441 = vsub.s32 0, %v440
        %v442 = vrot.slane %v431, %v441
        %v443 = vlaneseq
        %v444 = vshrl.u32 %v443, 7
        %v445 = vsub.s32 0, %v444
        %v446 = vrot.slane %v432, %v445
        %v447 = vlaneseq
        %v448 = vshrl.u32 %v447, 7
        %v449 = vsub.s32 0, %v448
        %v450 = vrot.slane %v433, %v449
        %v451 = vlaneseq
        %v452 = vshrl.u32 %v451, 7
        %v453 = vsub.s32 0, %v452
        %v454 = vrot.slane %v434, %v453
        %455 = vrot.lane.b32.xlu0 %v442, 2
        %v456 = vpop.permute.xlu0 %455
        %457 = vrot.lane.b32.xlu0 %v446, 2
        %v458 = vpop.permute.xlu0 %457
        %459 = vrot.lane.b32.xlu0 %v450, 2
        %v460 = vpop.permute.xlu0 %459
        %461 = vrot.lane.b32.xlu0 %v454, 2
        %v462 = vpop.permute.xlu0 %461
        %v467 = vmul.f32 %v305, %v456
        %v468 = vmul.f32 %v306, %v456
        %v469 = vmul.f32 %v307, %v458
        %v470 = vmul.f32 %v308, %v458
        %v471 = vmul.f32 %v309, %v460
        %v472 = vmul.f32 %v310, %v460
        %v473 = vmul.f32 %v311, %v462
        %v474 = vmul.f32 %v312, %v462
        %483 = vrot.lane.b32.xlu0 %v467, 126
        %v484 = vpop.permute.xlu0 %483
        %485 = vrot.lane.b32.xlu0 %v468, 126
        %v486 = vpop.permute.xlu0 %485
        %487 = vrot.lane.b32.xlu0 %v469, 126
        %v488 = vpop.permute.xlu0 %487
        %489 = vrot.lane.b32.xlu0 %v470, 126
        %v490 = vpop.permute.xlu0 %489
        %491 = vrot.lane.b32.xlu0 %v471, 126
        %v492 = vpop.permute.xlu0 %491
        %493 = vrot.lane.b32.xlu0 %v472, 126
        %v494 = vpop.permute.xlu0 %493
        %495 = vrot.lane.b32.xlu0 %v473, 126
        %v496 = vpop.permute.xlu0 %495
        %497 = vrot.lane.b32.xlu0 %v474, 126
        %v498 = vpop.permute.xlu0 %497
        %v507 = vadd.f32 %v422, %v484
        %v508 = vadd.f32 %v423, %v486
        %v509 = vadd.f32 %v424, %v488
        %v510 = vadd.f32 %v425, %v490
        %v511 = vadd.f32 %v426, %v492
        %v512 = vadd.f32 %v427, %v494
        %v513 = vadd.f32 %v428, %v496
        %v514 = vadd.f32 %v429, %v498
        %s515 = scalar_lea.vmem [#allocation6], 12
        %v516 = vld [vmem:[%s515] sm:$0x1]
        %v517 = vld [vmem:[%s515 + $0x1] sm:$0x1]
        %v518 = vld [vmem:[%s515 + $0x2] sm:$0x1]
        %v519 = vld [vmem:[%s515 + $0x3] sm:$0x1]
        %s520 = sadd.s32 %s299, 1
        %s521 = scalar_lea.vmem [#allocation2], %s520
        %v522 = vld [vmem:[%s521] sm:$0xff]
        %v523 = vld [vmem:[%s521 + $0x8] sm:$0xff]
        %v524 = vld [vmem:[%s521 + $0x18] sm:$0xff]
        %v525 = vld [vmem:[%s521 + $0x20] sm:$0xff]
        %v526 = vld [vmem:[%s521 + $0x30] sm:$0xff]
        %v527 = vld [vmem:[%s521 + $0x38] sm:$0xff]
        %v528 = vld [vmem:[%s521 + $0x48] sm:$0xff]
        %v529 = vld [vmem:[%s521 + $0x50] sm:$0xff]
        %v534 = vlaneseq
        %v535 = vshrl.u32 %v534, 7
        %v536 = vsub.s32 0, %v535
        %v537 = vrot.slane %v516, %v536
        %v538 = vlaneseq
        %v539 = vshrl.u32 %v538, 7
        %v540 = vsub.s32 0, %v539
        %v541 = vrot.slane %v517, %v540
        %v542 = vlaneseq
        %v543 = vshrl.u32 %v542, 7
        %v544 = vsub.s32 0, %v543
        %v545 = vrot.slane %v518, %v544
        %v546 = vlaneseq
        %v547 = vshrl.u32 %v546, 7
        %v548 = vsub.s32 0, %v547
        %v549 = vrot.slane %v519, %v548
        %v554 = vmul.f32 %v522, %v537
        %v555 = vmul.f32 %v523, %v537
        %v556 = vmul.f32 %v524, %v541
        %v557 = vmul.f32 %v525, %v541
        %v558 = vmul.f32 %v526, %v545
        %v559 = vmul.f32 %v527, %v545
        %v560 = vmul.f32 %v528, %v549
        %v561 = vmul.f32 %v529, %v549
        %v562 = vadd.f32 %v507, %v554
        %v563 = vadd.f32 %v508, %v555
        %v564 = vadd.f32 %v509, %v556
        %v565 = vadd.f32 %v510, %v557
        %v566 = vadd.f32 %v511, %v558
        %v567 = vadd.f32 %v512, %v559
        %v568 = vadd.f32 %v513, %v560
        %v569 = vadd.f32 %v514, %v561
        %s570 = scalar_lea.vmem [#allocation6], 16
        %v571 = vld [vmem:[%s570] sm:$0x1]
        %v572 = vld [vmem:[%s570 + $0x1] sm:$0x1]
        %v573 = vld [vmem:[%s570 + $0x2] sm:$0x1]
        %v574 = vld [vmem:[%s570 + $0x3] sm:$0x1]
        %v579 = vlaneseq
        %v580 = vshrl.u32 %v579, 7
        %v581 = vsub.s32 0, %v580
        %v582 = vrot.slane %v571, %v581
        %v583 = vlaneseq
        %v584 = vshrl.u32 %v583, 7
        %v585 = vsub.s32 0, %v584
        %v586 = vrot.slane %v572, %v585
        %v587 = vlaneseq
        %v588 = vshrl.u32 %v587, 7
        %v589 = vsub.s32 0, %v588
        %v590 = vrot.slane %v573, %v589
        %v591 = vlaneseq
        %v592 = vshrl.u32 %v591, 7
        %v593 = vsub.s32 0, %v592
        %v594 = vrot.slane %v574, %v593
        %595 = vrot.lane.b32.xlu0 %v582, 1
        %v596 = vpop.permute.xlu0 %595
        %597 = vrot.lane.b32.xlu0 %v586, 1
        %v598 = vpop.permute.xlu0 %597
        %599 = vrot.lane.b32.xlu0 %v590, 1
        %v600 = vpop.permute.xlu0 %599
        %601 = vrot.lane.b32.xlu0 %v594, 1
        %v602 = vpop.permute.xlu0 %601
        %v607 = vmul.f32 %v522, %v596
        %v608 = vmul.f32 %v523, %v596
        %v609 = vmul.f32 %v524, %v598
        %v610 = vmul.f32 %v525, %v598
        %v611 = vmul.f32 %v526, %v600
        %v612 = vmul.f32 %v527, %v600
        %v613 = vmul.f32 %v528, %v602
        %v614 = vmul.f32 %v529, %v602
        %623 = vrot.lane.b32.xlu0 %v607, 127
        %v624 = vpop.permute.xlu0 %623
        %625 = vrot.lane.b32.xlu0 %v608, 127
        %v626 = vpop.permute.xlu0 %625
        %627 = vrot.lane.b32.xlu0 %v609, 127
        %v628 = vpop.permute.xlu0 %627
        %629 = vrot.lane.b32.xlu0 %v610, 127
        %v630 = vpop.permute.xlu0 %629
        %631 = vrot.lane.b32.xlu0 %v611, 127
        %v632 = vpop.permute.xlu0 %631
        %633 = vrot.lane.b32.xlu0 %v612, 127
        %v634 = vpop.permute.xlu0 %633
        %635 = vrot.lane.b32.xlu0 %v613, 127
        %v636 = vpop.permute.xlu0 %635
        %637 = vrot.lane.b32.xlu0 %v614, 127
        %v638 = vpop.permute.xlu0 %637
        %v647 = vadd.f32 %v562, %v624
        %v648 = vadd.f32 %v563, %v626
        %v649 = vadd.f32 %v564, %v628
        %v650 = vadd.f32 %v565, %v630
        %v651 = vadd.f32 %v566, %v632
        %v652 = vadd.f32 %v567, %v634
        %v653 = vadd.f32 %v568, %v636
        %v654 = vadd.f32 %v569, %v638
        %s655 = scalar_lea.vmem [#allocation6], 20
        %v656 = vld [vmem:[%s655] sm:$0x1]
        %v657 = vld [vmem:[%s655 + $0x1] sm:$0x1]
        %v658 = vld [vmem:[%s655 + $0x2] sm:$0x1]
        %v659 = vld [vmem:[%s655 + $0x3] sm:$0x1]
        %v664 = vlaneseq
        %v665 = vshrl.u32 %v664, 7
        %v666 = vsub.s32 0, %v665
        %v667 = vrot.slane %v656, %v666
        %v668 = vlaneseq
        %v669 = vshrl.u32 %v668, 7
        %v670 = vsub.s32 0, %v669
        %v671 = vrot.slane %v657, %v670
        %v672 = vlaneseq
        %v673 = vshrl.u32 %v672, 7
        %v674 = vsub.s32 0, %v673
        %v675 = vrot.slane %v658, %v674
        %v676 = vlaneseq
        %v677 = vshrl.u32 %v676, 7
        %v678 = vsub.s32 0, %v677
        %v679 = vrot.slane %v659, %v678
        %680 = vrot.lane.b32.xlu0 %v667, 2
        %v681 = vpop.permute.xlu0 %680
        %682 = vrot.lane.b32.xlu0 %v671, 2
        %v683 = vpop.permute.xlu0 %682
        %684 = vrot.lane.b32.xlu0 %v675, 2
        %v685 = vpop.permute.xlu0 %684
        %686 = vrot.lane.b32.xlu0 %v679, 2
        %v687 = vpop.permute.xlu0 %686
        %v692 = vmul.f32 %v522, %v681
        %v693 = vmul.f32 %v523, %v681
        %v694 = vmul.f32 %v524, %v683
        %v695 = vmul.f32 %v525, %v683
        %v696 = vmul.f32 %v526, %v685
        %v697 = vmul.f32 %v527, %v685
        %v698 = vmul.f32 %v528, %v687
        %v699 = vmul.f32 %v529, %v687
        %708 = vrot.lane.b32.xlu0 %v692, 126
        %v709 = vpop.permute.xlu0 %708
        %710 = vrot.lane.b32.xlu0 %v693, 126
        %v711 = vpop.permute.xlu0 %710
        %712 = vrot.lane.b32.xlu0 %v694, 126
        %v713 = vpop.permute.xlu0 %712
        %714 = vrot.lane.b32.xlu0 %v695, 126
        %v715 = vpop.permute.xlu0 %714
        %716 = vrot.lane.b32.xlu0 %v696, 126
        %v717 = vpop.permute.xlu0 %716
        %718 = vrot.lane.b32.xlu0 %v697, 126
        %v719 = vpop.permute.xlu0 %718
        %720 = vrot.lane.b32.xlu0 %v698, 126
        %v721 = vpop.permute.xlu0 %720
        %722 = vrot.lane.b32.xlu0 %v699, 126
        %v723 = vpop.permute.xlu0 %722
        %v732 = vadd.f32 %v647, %v709
        %v733 = vadd.f32 %v648, %v711
        %v734 = vadd.f32 %v649, %v713
        %v735 = vadd.f32 %v650, %v715
        %v736 = vadd.f32 %v651, %v717
        %v737 = vadd.f32 %v652, %v719
        %v738 = vadd.f32 %v653, %v721
        %v739 = vadd.f32 %v654, %v723
        %s740 = scalar_lea.vmem [#allocation6], 24
        %v741 = vld [vmem:[%s740] sm:$0x1]
        %v742 = vld [vmem:[%s740 + $0x1] sm:$0x1]
        %v743 = vld [vmem:[%s740 + $0x2] sm:$0x1]
        %v744 = vld [vmem:[%s740 + $0x3] sm:$0x1]
        %s745 = sadd.s32 %s299, 2
        %s746 = scalar_lea.vmem [#allocation2], %s745
        %v747 = vld [vmem:[%s746] sm:$0xff]
        %v748 = vld [vmem:[%s746 + $0x8] sm:$0xff]
        %v749 = vld [vmem:[%s746 + $0x18] sm:$0xff]
        %v750 = vld [vmem:[%s746 + $0x20] sm:$0xff]
        %v751 = vld [vmem:[%s746 + $0x30] sm:$0xff]
        %v752 = vld [vmem:[%s746 + $0x38] sm:$0xff]
        %v753 = vld [vmem:[%s746 + $0x48] sm:$0xff]
        %v754 = vld [vmem:[%s746 + $0x50] sm:$0xff]
        %v759 = vlaneseq
        %v760 = vshrl.u32 %v759, 7
        %v761 = vsub.s32 0, %v760
        %v762 = vrot.slane %v741, %v761
        %v763 = vlaneseq
        %v764 = vshrl.u32 %v763, 7
        %v765 = vsub.s32 0, %v764
        %v766 = vrot.slane %v742, %v765
        %v767 = vlaneseq
        %v768 = vshrl.u32 %v767, 7
        %v769 = vsub.s32 0, %v768
        %v770 = vrot.slane %v743, %v769
        %v771 = vlaneseq
        %v772 = vshrl.u32 %v771, 7
        %v773 = vsub.s32 0, %v772
        %v774 = vrot.slane %v744, %v773
        %v779 = vmul.f32 %v747, %v762
        %v780 = vmul.f32 %v748, %v762
        %v781 = vmul.f32 %v749, %v766
        %v782 = vmul.f32 %v750, %v766
        %v783 = vmul.f32 %v751, %v770
        %v784 = vmul.f32 %v752, %v770
        %v785 = vmul.f32 %v753, %v774
        %v786 = vmul.f32 %v754, %v774
        %v787 = vadd.f32 %v732, %v779
        %v788 = vadd.f32 %v733, %v780
        %v789 = vadd.f32 %v734, %v781
        %v790 = vadd.f32 %v735, %v782
        %v791 = vadd.f32 %v736, %v783
        %v792 = vadd.f32 %v737, %v784
        %v793 = vadd.f32 %v738, %v785
        %v794 = vadd.f32 %v739, %v786
        %s795 = scalar_lea.vmem [#allocation6], 28
        %v796 = vld [vmem:[%s795] sm:$0x1]
        %v797 = vld [vmem:[%s795 + $0x1] sm:$0x1]
        %v798 = vld [vmem:[%s795 + $0x2] sm:$0x1]
        %v799 = vld [vmem:[%s795 + $0x3] sm:$0x1]
        %v804 = vlaneseq
        %v805 = vshrl.u32 %v804, 7
        %v806 = vsub.s32 0, %v805
        %v807 = vrot.slane %v796, %v806
        %v808 = vlaneseq
        %v809 = vshrl.u32 %v808, 7
        %v810 = vsub.s32 0, %v809
        %v811 = vrot.slane %v797, %v810
        %v812 = vlaneseq
        %v813 = vshrl.u32 %v812, 7
        %v814 = vsub.s32 0, %v813
        %v815 = vrot.slane %v798, %v814
        %v816 = vlaneseq
        %v817 = vshrl.u32 %v816, 7
        %v818 = vsub.s32 0, %v817
        %v819 = vrot.slane %v799, %v818
        %820 = vrot.lane.b32.xlu0 %v807, 1
        %v821 = vpop.permute.xlu0 %820
        %822 = vrot.lane.b32.xlu0 %v811, 1
        %v823 = vpop.permute.xlu0 %822
        %824 = vrot.lane.b32.xlu0 %v815, 1
        %v825 = vpop.permute.xlu0 %824
        %826 = vrot.lane.b32.xlu0 %v819, 1
        %v827 = vpop.permute.xlu0 %826
        %v832 = vmul.f32 %v747, %v821
        %v833 = vmul.f32 %v748, %v821
        %v834 = vmul.f32 %v749, %v823
        %v835 = vmul.f32 %v750, %v823
        %v836 = vmul.f32 %v751, %v825
        %v837 = vmul.f32 %v752, %v825
        %v838 = vmul.f32 %v753, %v827
        %v839 = vmul.f32 %v754, %v827
        %848 = vrot.lane.b32.xlu0 %v832, 127
        %v849 = vpop.permute.xlu0 %848
        %850 = vrot.lane.b32.xlu0 %v833, 127
        %v851 = vpop.permute.xlu0 %850
        %852 = vrot.lane.b32.xlu0 %v834, 127
        %v853 = vpop.permute.xlu0 %852
        %854 = vrot.lane.b32.xlu0 %v835, 127
        %v855 = vpop.permute.xlu0 %854
        %856 = vrot.lane.b32.xlu0 %v836, 127
        %v857 = vpop.permute.xlu0 %856
        %858 = vrot.lane.b32.xlu0 %v837, 127
        %v859 = vpop.permute.xlu0 %858
        %860 = vrot.lane.b32.xlu0 %v838, 127
        %v861 = vpop.permute.xlu0 %860
        %862 = vrot.lane.b32.xlu0 %v839, 127
        %v863 = vpop.permute.xlu0 %862
        %v872 = vadd.f32 %v787, %v849
        %v873 = vadd.f32 %v788, %v851
        %v874 = vadd.f32 %v789, %v853
        %v875 = vadd.f32 %v790, %v855
        %v876 = vadd.f32 %v791, %v857
        %v877 = vadd.f32 %v792, %v859
        %v878 = vadd.f32 %v793, %v861
        %v879 = vadd.f32 %v794, %v863
        %s880 = scalar_lea.vmem [#allocation6], 32
        %v881 = vld [vmem:[%s880] sm:$0x1]
        %v882 = vld [vmem:[%s880 + $0x1] sm:$0x1]
        %v883 = vld [vmem:[%s880 + $0x2] sm:$0x1]
        %v884 = vld [vmem:[%s880 + $0x3] sm:$0x1]
        %v889 = vlaneseq
        %v890 = vshrl.u32 %v889, 7
        %v891 = vsub.s32 0, %v890
        %v892 = vrot.slane %v881, %v891
        %v893 = vlaneseq
        %v894 = vshrl.u32 %v893, 7
        %v895 = vsub.s32 0, %v894
        %v896 = vrot.slane %v882, %v895
        %v897 = vlaneseq
        %v898 = vshrl.u32 %v897, 7
        %v899 = vsub.s32 0, %v898
        %v900 = vrot.slane %v883, %v899
        %v901 = vlaneseq
        %v902 = vshrl.u32 %v901, 7
        %v903 = vsub.s32 0, %v902
        %v904 = vrot.slane %v884, %v903
        %905 = vrot.lane.b32.xlu0 %v892, 2
        %v906 = vpop.permute.xlu0 %905
        %907 = vrot.lane.b32.xlu0 %v896, 2
        %v908 = vpop.permute.xlu0 %907
        %909 = vrot.lane.b32.xlu0 %v900, 2
        %v910 = vpop.permute.xlu0 %909
        %911 = vrot.lane.b32.xlu0 %v904, 2
        %v912 = vpop.permute.xlu0 %911
        %v917 = vmul.f32 %v747, %v906
        %v918 = vmul.f32 %v748, %v906
        %v919 = vmul.f32 %v749, %v908
        %v920 = vmul.f32 %v750, %v908
        %v921 = vmul.f32 %v751, %v910
        %v922 = vmul.f32 %v752, %v910
        %v923 = vmul.f32 %v753, %v912
        %v924 = vmul.f32 %v754, %v912
        %933 = vrot.lane.b32.xlu0 %v917, 126
        %v934 = vpop.permute.xlu0 %933
        %935 = vrot.lane.b32.xlu0 %v918, 126
        %v936 = vpop.permute.xlu0 %935
        %937 = vrot.lane.b32.xlu0 %v919, 126
        %v938 = vpop.permute.xlu0 %937
        %939 = vrot.lane.b32.xlu0 %v920, 126
        %v940 = vpop.permute.xlu0 %939
        %941 = vrot.lane.b32.xlu0 %v921, 126
        %v942 = vpop.permute.xlu0 %941
        %943 = vrot.lane.b32.xlu0 %v922, 126
        %v944 = vpop.permute.xlu0 %943
        %945 = vrot.lane.b32.xlu0 %v923, 126
        %v946 = vpop.permute.xlu0 %945
        %947 = vrot.lane.b32.xlu0 %v924, 126
        %v948 = vpop.permute.xlu0 %947
        %v957 = vadd.f32 %v872, %v934
        %v958 = vadd.f32 %v873, %v936
        %v959 = vadd.f32 %v874, %v938
        %v960 = vadd.f32 %v875, %v940
        %v961 = vadd.f32 %v876, %v942
        %v962 = vadd.f32 %v877, %v944
        %v963 = vadd.f32 %v878, %v946
        %v964 = vadd.f32 %v879, %v948
        %v965 = vcombine.low %v957, %v961
        %v966 = vcombine.high %v957, %v961
        %v968 = vunpack.c.l.s4 1983009808
        %v969 = vunpack.c.0.s8 %v968
        %v970 = vlaneseq
        %v971 = vshrl.u32 %v970, 7
        %v972 = vsub.s32 %v969, %v971
        %v973 = vrot.slane %v965, %v972
        %v975 = vunpack.c.l.s4 1983009808
        %v976 = vunpack.c.0.s8 %v975
        %v977 = vlaneseq
        %v978 = vshrl.u32 %v977, 7
        %v979 = vsub.s32 %v976, %v978
        %v980 = vrot.slane %v966, %v979
        %v981 = vcombine.low %v959, %v963
        %v982 = vcombine.high %v959, %v963
        %v984 = vunpack.c.l.s4 1983009808
        %v985 = vunpack.c.0.s8 %v984
        %v986 = vlaneseq
        %v987 = vshrl.u32 %v986, 7
        %v988 = vsub.s32 %v985, %v987
        %v989 = vrot.slane %v981, %v988
        %v991 = vunpack.c.l.s4 1983009808
        %v992 = vunpack.c.0.s8 %v991
        %v993 = vlaneseq
        %v994 = vshrl.u32 %v993, 7
        %v995 = vsub.s32 %v992, %v994
        %v996 = vrot.slane %v982, %v995
        %v997 = vcombine.low %v973, %v989
        %v998 = vcombine.high %v973, %v989
        %v1000 = vunpack.c.l.s4 1934713408
        %v1001 = vunpack.c.0.s8 %v1000
        %v1002 = vlaneseq
        %v1003 = vshrl.u32 %v1002, 7
        %v1004 = vsub.s32 %v1001, %v1003
        %v1005 = vrot.slane %v997, %v1004
        %v1007 = vunpack.c.l.s4 1934713408
        %v1008 = vunpack.c.0.s8 %v1007
        %v1009 = vlaneseq
        %v1010 = vshrl.u32 %v1009, 7
        %v1011 = vsub.s32 %v1008, %v1010
        %v1012 = vrot.slane %v998, %v1011
        %v1013 = vcombine.low %v980, %v996
        %v1014 = vcombine.high %v980, %v996
        %v1016 = vunpack.c.l.s4 1934713408
        %v1017 = vunpack.c.0.s8 %v1016
        %v1018 = vlaneseq
        %v1019 = vshrl.u32 %v1018, 7
        %v1020 = vsub.s32 %v1017, %v1019
        %v1021 = vrot.slane %v1013, %v1020
        %v1023 = vunpack.c.l.s4 1934713408
        %v1024 = vunpack.c.0.s8 %v1023
        %v1025 = vlaneseq
        %v1026 = vshrl.u32 %v1025, 7
        %v1027 = vsub.s32 %v1024, %v1026
        %v1028 = vrot.slane %v1014, %v1027
        %v1029 = vcombine.high %v1005, 0.0
        %v1030 = vcombine.high %v1012, 0.0
        %v1031 = vcombine.high %v1021, 0.0
        %v1032 = vcombine.high %v1028, 0.0
        %v1033 = vcombine.low %v958, %v962
        %v1034 = vcombine.high %v958, %v962
        %v1036 = vunpack.c.l.s4 1983009808
        %v1037 = vunpack.c.0.s8 %v1036
        %v1038 = vlaneseq
        %v1039 = vshrl.u32 %v1038, 7
        %v1040 = vsub.s32 %v1037, %v1039
        %v1041 = vrot.slane %v1033, %v1040
        %v1043 = vunpack.c.l.s4 1983009808
        %v1044 = vunpack.c.0.s8 %v1043
        %v1045 = vlaneseq
        %v1046 = vshrl.u32 %v1045, 7
        %v1047 = vsub.s32 %v1044, %v1046
        %v1048 = vrot.slane %v1034, %v1047
        %v1049 = vcombine.low %v960, %v964
        %v1050 = vcombine.high %v960, %v964
        %v1052 = vunpack.c.l.s4 1983009808
        %v1053 = vunpack.c.0.s8 %v1052
        %v1054 = vlaneseq
        %v1055 = vshrl.u32 %v1054, 7
        %v1056 = vsub.s32 %v1053, %v1055
        %v1057 = vrot.slane %v1049, %v1056
        %v1059 = vunpack.c.l.s4 1983009808
        %v1060 = vunpack.c.0.s8 %v1059
        %v1061 = vlaneseq
        %v1062 = vshrl.u32 %v1061, 7
        %v1063 = vsub.s32 %v1060, %v1062
        %v1064 = vrot.slane %v1050, %v1063
        %v1065 = vcombine.low %v1041, %v1057
        %v1066 = vcombine.high %v1041, %v1057
        %v1068 = vunpack.c.l.s4 1934713408
        %v1069 = vunpack.c.0.s8 %v1068
        %v1070 = vlaneseq
        %v1071 = vshrl.u32 %v1070, 7
        %v1072 = vsub.s32 %v1069, %v1071
        %v1073 = vrot.slane %v1065, %v1072
        %v1075 = vunpack.c.l.s4 1934713408
        %v1076 = vunpack.c.0.s8 %v1075
        %v1077 = vlaneseq
        %v1078 = vshrl.u32 %v1077, 7
        %v1079 = vsub.s32 %v1076, %v1078
        %v1080 = vrot.slane %v1066, %v1079
        %v1081 = vcombine.low %v1048, %v1064
        %v1082 = vcombine.high %v1048, %v1064
        %v1084 = vunpack.c.l.s4 1934713408
        %v1085 = vunpack.c.0.s8 %v1084
        %v1086 = vlaneseq
        %v1087 = vshrl.u32 %v1086, 7
        %v1088 = vsub.s32 %v1085, %v1087
        %v1089 = vrot.slane %v1081, %v1088
        %v1091 = vunpack.c.l.s4 1934713408
        %v1092 = vunpack.c.0.s8 %v1091
        %v1093 = vlaneseq
        %v1094 = vshrl.u32 %v1093, 7
        %v1095 = vsub.s32 %v1092, %v1094
        %v1096 = vrot.slane %v1082, %v1095
        %v1097 = vcombine.high %v1073, 0.0
        %v1098 = vcombine.high %v1080, 0.0
        %v1099 = vcombine.high %v1089, 0.0
        %v1100 = vcombine.high %v1096, 0.0
        %1102 = vrot.lane.b32.xlu0 %v1029, 16
        %v1103 = vpop.permute.xlu0 %1102
        %1106 = vrot.lane.b32.xlu0 %v1012, 32
        %v1107 = vpop.permute.xlu0 %1106
        %1110 = vrot.lane.b32.xlu0 %v1030, 48
        %v1111 = vpop.permute.xlu0 %1110
        %1114 = vrot.lane.b32.xlu0 %v1021, 64
        %v1115 = vpop.permute.xlu0 %1114
        %1118 = vrot.lane.b32.xlu0 %v1031, 80
        %v1119 = vpop.permute.xlu0 %1118
        %1122 = vrot.lane.b32.xlu0 %v1028, 96
        %v1123 = vpop.permute.xlu0 %1122
        %1126 = vrot.lane.b32.xlu0 %v1032, 112
        %v1127 = vpop.permute.xlu0 %1126
        %1130 = vrot.lane.b32.xlu0 %v1097, 16
        %v1131 = vpop.permute.xlu0 %1130
        %1134 = vrot.lane.b32.xlu0 %v1080, 32
        %v1135 = vpop.permute.xlu0 %1134
        %1138 = vrot.lane.b32.xlu0 %v1098, 48
        %v1139 = vpop.permute.xlu0 %1138
        %1142 = vrot.lane.b32.xlu0 %v1089, 64
        %v1143 = vpop.permute.xlu0 %1142
        %1146 = vrot.lane.b32.xlu0 %v1099, 80
        %v1147 = vpop.permute.xlu0 %1146
        %1150 = vrot.lane.b32.xlu0 %v1096, 96
        %v1151 = vpop.permute.xlu0 %1150
        %1154 = vrot.lane.b32.xlu0 %v1100, 112
        %v1155 = vpop.permute.xlu0 %1154
        %vm1157 = vcmask 130048
        %v1158 = vsel %vm1157, %v1005, %v1103
        %vm1159 = vcmask 261120
        %v1160 = vsel %vm1159, %v1158, %v1107
        %vm1161 = vcmask 392192
        %v1162 = vsel %vm1161, %v1160, %v1111
        %vm1163 = vcmask 523264
        %v1164 = vsel %vm1163, %v1162, %v1115
        %vm1165 = vcmask 654336
        %v1166 = vsel %vm1165, %v1164, %v1119
        %vm1167 = vcmask 785408
        %v1168 = vsel %vm1167, %v1166, %v1123
        %vm1169 = vcmask 916480
        %v1170 = vsel %vm1169, %v1168, %v1127
        %v1171 = vsel %vm1157, %v1073, %v1131
        %v1172 = vsel %vm1159, %v1171, %v1135
        %v1173 = vsel %vm1161, %v1172, %v1139
        %v1174 = vsel %vm1163, %v1173, %v1143
        %v1175 = vsel %vm1165, %v1174, %v1147
        %v1176 = vsel %vm1167, %v1175, %v1151
        %v1177 = vsel %vm1169, %v1176, %v1155
        %v1178 = vld [vmem:[%s2] sm:$0xff]
        %1180 = vset.pattern.permute.xlu0 0
        %1181 = vperm.xlu0 %1180, %v1178
        %v1182 = vpop.permute.xlu0 %1181
        %v1184 = vlaneseq
        %v1185 = vshrl.u32 %v1184, 7
        %v1186 = vsub.s32 0, %v1185
        %v1187 = vrot.slane %v1170, %v1186
        %v1188 = vlaneseq
        %v1189 = vshrl.u32 %v1188, 7
        %v1190 = vsub.s32 0, %v1189
        %v1191 = vrot.slane %v1177, %v1190
        %v1192 = vmul.f32 %v1182, %v1187
        %v1193 = vmul.f32 %v1182, %v1191
        %1194 = vset.pattern.permute.xlu0 1
        %1195 = vperm.xlu0 %1194, %v1178
        %v1196 = vpop.permute.xlu0 %1195
        %v1198 = vlaneseq
        %v1199 = vshrl.u32 %v1198, 7
        %v1200 = vsub.s32 1, %v1199
        %v1201 = vrot.slane %v1170, %v1200
        %v1202 = vlaneseq
        %v1203 = vshrl.u32 %v1202, 7
        %v1204 = vsub.s32 1, %v1203
        %v1205 = vrot.slane %v1177, %v1204
        %v1206 = vmul.f32 %v1196, %v1201
        %v1207 = vmul.f32 %v1196, %v1205
        %v1208 = vadd.f32 %v1192, %v1206
        %v1209 = vadd.f32 %v1193, %v1207
        %1210 = vset.pattern.permute.xlu0 2
        %1211 = vperm.xlu0 %1210, %v1178
        %v1212 = vpop.permute.xlu0 %1211
        %v1214 = vlaneseq
        %v1215 = vshrl.u32 %v1214, 7
        %v1216 = vsub.s32 2, %v1215
        %v1217 = vrot.slane %v1170, %v1216
        %v1218 = vlaneseq
        %v1219 = vshrl.u32 %v1218, 7
        %v1220 = vsub.s32 2, %v1219
        %v1221 = vrot.slane %v1177, %v1220
        %v1222 = vmul.f32 %v1212, %v1217
        %v1223 = vmul.f32 %v1212, %v1221
        %v1224 = vadd.f32 %v1208, %v1222
        %v1225 = vadd.f32 %v1209, %v1223
        %1226 = vset.pattern.permute.xlu0 3
        %1227 = vperm.xlu0 %1226, %v1178
        %v1228 = vpop.permute.xlu0 %1227
        %v1230 = vlaneseq
        %v1231 = vshrl.u32 %v1230, 7
        %v1232 = vsub.s32 3, %v1231
        %v1233 = vrot.slane %v1170, %v1232
        %v1234 = vlaneseq
        %v1235 = vshrl.u32 %v1234, 7
        %v1236 = vsub.s32 3, %v1235
        %v1237 = vrot.slane %v1177, %v1236
        %v1238 = vmul.f32 %v1228, %v1233
        %v1239 = vmul.f32 %v1228, %v1237
        %v1240 = vadd.f32 %v1224, %v1238
        %v1241 = vadd.f32 %v1225, %v1239
        %1242 = vst [vmem:[%s217] sm:$0xff] %v1240
        %1243 = vst [vmem:[%s217 + $0x8] sm:$0xff] %v1241
        %s1244 = sand.u32 %s111, 1
        %s1245 = scalar_lea.sflag [#allocation5], %s1244
        %s1246 = sand.u32 %s111, 1
        %s1247 = smul.addr %s1246, 16
        %s1248 = scalar_lea.vmem [#allocation8], %s1247
        // Predicated region
        $region45: #{tpu_custom_call.1} parent=31 // pred_check
          %p1249 = pneg %p121
        $region46: #{tpu_custom_call.1} parent=31 // pred_check_branch
          %1251 = sbr.rel (%p1249) target = $region48
        $region47: #{tpu_custom_call.1} parent=31 // pred_region
          %s1252 = smul.u32 2, %s26
          %s1254 = ssub.s32 256, 256
          %1255 = vsyncadd %s1245, %s1254
          %s1256 = smul.addr %s25, 2
          %s1257 = sadd.s32 %s1252, %s1256
          %s1258 = smul.addr %s1257, 128
          %s1259 = scalar_lea.hbm %s3, %s1258
          %s1261 = sshll.u32 %s1248, 4
          %s1262 = int_to_ptr.vmem [resolvable:$true] %s1261
          %1264 = dma.vmem_to_hbm [thread:$0]  %s1262, 256, %s1259, %s1245
        $region48: #{tpu_custom_call.1} parent=31 // pred_fallthru
          _
      $region32: #{tpu_custom_call.1} parent=5 // pred_fallthru
        _
      %p1265 = scmp.le.s32.totalorder 2, %s16
      // Predicated region
      $region49: #{tpu_custom_call.1} parent=5 // pred_check
        %p1266 = pneg %p1265
      $region50: #{tpu_custom_call.1} parent=5 // pred_check_branch
        %1268 = sbr.rel (%p1266) target = $region52
      $region51: #{tpu_custom_call.1} parent=5 // pred_region
        %s1269 = ssub.s32 %s16, 2
        // Predicated region
        $region53: #{tpu_custom_call.1} parent=51 // pred_check
          %p1270 = pneg %p127
        $region54: #{tpu_custom_call.1} parent=51 // pred_check_branch
          %1272 = sbr.rel (%p1270) target = $region56
        $region55: #{tpu_custom_call.1} parent=51 // pred_region
          %s1273 = sand.u32 %s112, 1
          %s1274 = scalar_lea.sflag [#allocation5], %s1273
          %s1275 = sand.u32 %s112, 1
          %s1276 = smul.addr %s1275, 16
          %s1277 = scalar_lea.vmem [#allocation8], %s1276
          %1278 = dma.done %s1274, 256
        $region56: #{tpu_custom_call.1} parent=51 // pred_fallthru
          _
      $region52: #{tpu_custom_call.1} parent=5 // pred_fallthru
        _
    $region6: #{tpu_custom_call.1} parent=1 // loop_footer
      %s20 = sadd.s32 1, %s16
    $region7: #{tpu_custom_call.1} parent=1 // loop_footer_branch
      %15 = sbr.rel target = $region3
    $region8: #{tpu_custom_call.1} parent=1 // loop_exit
      _
    %1279 = vsyncpa [#allocation4], 1
    %s1280 = scalar_lea.sflag [#allocation4], 1
    %1281 = vsyncpa %s1280, 1
    %1282 = vsyncpa [#allocation7], 1
    %1283 = vsyncpa [#allocation5], 1
    %s1284 = scalar_lea.sflag [#allocation5], 1
    %1285 = vsyncpa %s1284, 1

</llo_original>
